<compile_context>
chip_gen: v7x
topology: tpu7x:2x2x1
jax: 0.10.0
libtpu: 0.0.40
codegen_flags: <defaults>
</compile_context>

<pallas_src>
from functools import partial

import jax
import jax.numpy as jnp
from jax.experimental import pallas as pl
from jax.experimental.pallas import tpu as pltpu


def _structural_loss_kernel(
    obs2d_ref,    # (B*N, D)     obs_ex node features, pre-reshaped in the wrapper   VMEM
    eggs_ref,     # (B, 2*Ng, D) gen_egg[0] | obs_egg[0] concatenated on axis 1      VMEM
    gen_act_ref,  # (B, Na, H)   gen_acts["hidden"]                                  VMEM
    p_ref,        # (rows, 128)  packed params (one DMA, see pack fn for layout)     VMEM
    s_ref,        # (2,)         [gamma, bg]                                         SMEM
    out_ref,      # (1, B)       lane-dense per-graph loss                           VMEM
    *, dims,
):
    D, H, C, r_w2, r_b1, r_b2, r_wga, r_wgb, r_tgt = dims
    f32 = jnp.float32
    BN = obs2d_ref.shape[0]
    B, two_ng, _ = eggs_ref.shape
    Ng = two_ng // 2
    N = BN // B

    # ---- unpack parameters (static slices of the single packed VMEM tile) ----
    w1  = p_ref[0:D, 0:H]              # (D, H)   explainee layer 1
    w2s = p_ref[r_w2:r_w2 + H, 0:C]    # (H, C)   classifier, 1/N pooling folded in
    b1  = p_ref[r_b1:r_b1 + BN, 0:H]   # (BN, H)  bias replicated -> no in-kernel broadcast
    b2  = p_ref[r_b2:r_b2 + B, 0:C]    # (B, C)
    wga = p_ref[r_wga:r_wga + B, 0:D]  # (B, D)   GED head (gen half), 1/Ng folded in
    wgb = p_ref[r_wgb:r_wgb + B, 0:D]  # (B, D)   GED head (obs half), 1/Ng folded in
    tgt = p_ref[r_tgt:r_tgt + B, 0:C]  # (B, C)   soft target replicated per graph
    gamma = s_ref[0]
    bg = s_ref[1]

    # ---- explainee forward; hooked activation = hidden layer output ----
    # One fused (B*N, D) @ (D, H) MXU matmul (input already reshaped in the wrapper).
    h = jnp.maximum(jnp.dot(obs2d_ref[...], w1, preferred_element_type=f32) + b1, 0.0)
    # global_mean_pool: sum-pool here, the 1/N factor lives in w2s; the cosine term below is
    # scale invariant, so the sum-pooled activations can be used there directly as well.
    pooled = jnp.sum(h.reshape(B, N, H), axis=1)                           # (B, H)
    logits = jnp.dot(pooled, w2s, preferred_element_type=f32) + b2         # (B, C)

    # F.softmax(explainee(obs_ex), dim=-1) -- exact divide: one (B,1) reciprocal saturates
    # nothing, and the approx-EUP error was being cubed through omega for zero perf gain.
    m = jnp.max(logits, axis=-1, keepdims=True)
    e = jnp.exp(logits - m)
    pred = e / jnp.sum(e, axis=-1, keepdims=True)                          # (B, C)

    # ---- approx_GED = GED_fn(*gen_egg, *obs_egg): VPU multiply + lane reduce (no MXU) ----
    gpool = jnp.sum(eggs_ref[:, 0:Ng, :], axis=1)                          # (B, D) sum-pool
    opool = jnp.sum(eggs_ref[:, Ng:two_ng, :], axis=1)                     # (B, D)
    approx_ged = (jnp.sum(gpool * wga, axis=-1)
                  + jnp.sum(opool * wgb, axis=-1) + bg)                    # (B,)

    # ---- embed_loss = dict_cos_dist(activations, gen_acts, expand2=False) ----
    a1 = pooled                                                            # pooled hooked acts
    a2 = jnp.sum(gen_act_ref[...], axis=1)                                 # (B, H); cosine is scale-free
    eps = jnp.float32(1e-8)
    dp  = jnp.sum(a1 * a2, axis=-1)                                        # (B,)
    sq1 = jnp.sum(a1 * a1, axis=-1)
    sq2 = jnp.sum(a2 * a2, axis=-1)
    # max(sqrt(s), eps) == sqrt(max(s, eps^2)); rsqrt keeps the divide off the VALU (EUP op).
    inv_norm = (jax.lax.rsqrt(jnp.maximum(sq1, eps * eps))
                * jax.lax.rsqrt(jnp.maximum(sq2, eps * eps)))
    embed_loss = 1.0 - dp * inv_norm                                       # (B,)  (mean over 1 key)

    # ---- omega = (gamma - CE(explainee_pred, target.expand_as(pred)))**3 ----
    # CrossEntropyLoss(reduction='none') with probability targets applied to the ALREADY
    # SOFTMAXED pred (double softmax -- intentional, matches the torch module exactly).
    pm = jnp.max(pred, axis=-1, keepdims=True)
    lse = jnp.log(jnp.sum(jnp.exp(pred - pm), axis=-1, keepdims=True)) + pm
    ce = -jnp.sum(tgt * (pred - lse), axis=-1)                             # (B,)
    omega = (gamma - ce) ** 3                                              # (B,)

    # ---- return omega * (approx_GED + embed_loss): single lane-dense store ----
    out_ref[...] = (omega * (approx_ged + embed_loss)).reshape(1, B)


def pack_structural_loss_params(params, target, gamma, *, B, N, Ng):
    """Pack all small parameters into ONE (rows, 128) f32 VMEM tile + a (2,) SMEM scalar vec.

    Built with a single jnp.concatenate of lane-padded blocks (no serialized .at[].set()
    chain -- that prologue was longer than the kernel itself).  Pooling factors 1/N and 1/Ng
    are folded into w2 / wga / wgb here, and single-row params are replicated to the extent
    their in-kernel consumer needs, so the kernel does no sublane broadcasts.
    Call this ONCE and reuse the result whenever params/target/gamma are static across steps.
    NOTE: the packed tile is specific to (B, N); repack if the batch shape changes.
    """
    f32 = jnp.float32
    D, H = params["w1"].shape
    C = params["w2"].shape[1]
    BN = B * N

    def lanes(x):  # pad a (rows_i, cols) block out to the full 128-lane width
        return jnp.pad(x.astype(f32), ((0, 0), (0, 128 - x.shape[1])))

    wga_row = (params["wga"][:, 0] / Ng)[None, :]      # (1, D), 1/Ng folded
    wgb_row = (params["wgb"][:, 0] / Ng)[None, :]
    blocks = [
        lanes(params["w1"]),                              # rows [0, D)
        lanes(params["w2"] / N),                          # rows [D, D+H), 1/N folded
        lanes(jnp.broadcast_to(params["b1"], (BN, H))),   # b1 replicated to (BN, H)
        lanes(jnp.broadcast_to(params["b2"], (B, C))),    # b2 replicated to (B, C)
        lanes(jnp.broadcast_to(wga_row, (B, D))),         # GED head (gen half)
        lanes(jnp.broadcast_to(wgb_row, (B, D))),         # GED head (obs half)
        lanes(jnp.broadcast_to(target, (B, C))),          # soft target per graph
    ]
    r_w2 = D
    r_b1 = D + H
    r_b2 = r_b1 + BN
    r_wga = r_b2 + B
    r_wgb = r_wga + B
    r_tgt = r_wgb + B
    rows_used = r_tgt + B
    rows = ((rows_used + 7) // 8) * 8
    if rows > rows_used:
        blocks.append(jnp.zeros((rows - rows_used, 128), f32))
    packed = jnp.concatenate(blocks, axis=0)

    # True scalars (gamma, bg) live in SMEM instead of their own padded VMEM tiles.
    scalars = jnp.stack([gamma.reshape(()), params["bg"].reshape(())]).astype(f32)
    dims = (D, H, C, r_w2, r_b1, r_b2, r_wga, r_wgb, r_tgt)
    return packed, scalars, dims


@partial(jax.jit, static_argnames=("dims",))
def structural_loss_pallas(obs_nodes, gen_egg0, obs_egg0, gen_act, packed, scalars, dims):
    """omega * (approx_GED + embed_loss) per graph, fused into one Pallas kernel."""
    B, N, D = obs_nodes.shape
    # Layout plumbing only (free in XLA): pre-reshape obs nodes so the kernel needs no input
    # reshape, and merge the two identically-shaped egg tensors into a single VMEM input
    # (5 kernel inputs instead of 6 -> one fewer fixed-cost DMA in an overhead-bound kernel).
    obs2d = obs_nodes.reshape(B * N, D)
    eggs = jnp.concatenate([gen_egg0, obs_egg0], axis=1)          # (B, 2*Ng, D)

    vmem = pl.BlockSpec(memory_space=pltpu.MemorySpace.VMEM)
    smem = pl.BlockSpec(memory_space=pltpu.MemorySpace.SMEM)
    out = pl.pallas_call(
        partial(_structural_loss_kernel, dims=dims),
        out_shape=jax.ShapeDtypeStruct((1, B), jnp.float32),      # lane-dense output
        in_specs=[vmem, vmem, vmem, vmem, smem],
        out_specs=vmem,
    )(obs2d, eggs, gen_act, packed, scalars)
    return out[0]


def structural_loss_ref(obs_nodes, gen_egg0, obs_egg0, gen_act, params, target, gamma):
    """Pure-JAX reference (same math, full-precision f32 matmuls) used to validate the kernel."""
    hp = jax.lax.Precision.HIGHEST
    hidden = jnp.maximum(
        jnp.einsum("bnd,dh->bnh", obs_nodes, params["w1"], precision=hp) + params["b1"], 0.0)
    pooled = jnp.mean(hidden, axis=1)
    logits = jnp.dot(pooled, params["w2"], precision=hp) + params["b2"]
    pred = jax.nn.softmax(logits, axis=-1)

    gpool = jnp.mean(gen_egg0, axis=1)
    opool = jnp.mean(obs_egg0, axis=1)
    approx_ged = (jnp.dot(gpool, params["wga"], precision=hp)
                  + jnp.dot(opool, params["wgb"], precision=hp) + params["bg"])[:, 0]

    a1 = pooled
    a2 = jnp.mean(gen_act, axis=1)
    eps = 1e-8
    n1 = jnp.maximum(jnp.linalg.norm(a1, axis=-1), eps)
    n2 = jnp.maximum(jnp.linalg.norm(a2, axis=-1), eps)
    cos_sim = jnp.sum(a1 * a2, axis=-1) / (n1 * n2)
    embed_loss = 1.0 - cos_sim

    logsm = jax.nn.log_softmax(pred, axis=-1)          # CE on the already-softmaxed pred (by design)
    ce = -jnp.sum(target * logsm, axis=-1)
    omega = (gamma[0, 0] - ce) ** 3
    return omega * (approx_ged + embed_loss)


if __name__ == "__main__":
    B, N, D, H, C = 4, 8, 16, 32, 8   # graphs, nodes/graph, node feat, hidden, classes
    Ng, Na = 8, 8                     # nodes in egg tensors / gen activation graphs

    key = jax.random.PRNGKey(0)
    ks = jax.random.split(key, 12)

    # inputs
    obs_nodes = jax.random.normal(ks[0], (B, N, D), jnp.float32)      # obs_ex node features (dense batch)
    gen_egg0  = jax.random.normal(ks[1], (B, Ng, D), jnp.float32)     # gen_egg[0]
    obs_egg0  = jax.random.normal(ks[2], (B, Ng, D), jnp.float32)     # obs_egg[0]
    gen_act   = jax.random.normal(ks[3], (B, Na, H), jnp.float32)     # gen_acts["hidden"]

    # deterministic synthetic parameters (module __init__ components)
    params = {
        "w1":  jax.random.normal(ks[4], (D, H), jnp.float32) * 0.1,   # explainee layer 1
        "b1":  jax.random.normal(ks[5], (1, H), jnp.float32) * 0.1,
        "w2":  jax.random.normal(ks[6], (H, C), jnp.float32) * 0.1,   # explainee classifier
        "b2":  jax.random.normal(ks[7], (1, C), jnp.float32) * 0.1,
        "wga": jax.random.normal(ks[8], (D, 1), jnp.float32) * 0.1,   # GED_fn head (gen half)
        "wgb": jax.random.normal(ks[9], (D, 1), jnp.float32) * 0.1,   # GED_fn head (obs half)
        "bg":  jnp.full((1, 1), 0.05, jnp.float32),
    }
    target = jax.nn.softmax(jax.random.normal(ks[10], (1, C), jnp.float32), axis=-1)  # soft target
    gamma = jnp.full((1, 1), 0.5, jnp.float32)

    # Pack once (pure prologue) -- reuse across steps whenever params/target/gamma are static.
    packed, scalars, dims = pack_structural_loss_params(params, target, gamma, B=B, N=N, Ng=Ng)

    out = structural_loss_pallas(obs_nodes, gen_egg0, obs_egg0, gen_act, packed, scalars, dims=dims)
    out = jax.block_until_ready(out)

    ref = structural_loss_ref(obs_nodes, gen_egg0, obs_egg0, gen_act, params, target, gamma)
    assert out.shape == (B,)
    # With the exact softmax divide the kernel agrees with the full-precision reference to
    # ~1e-5; tolerance 1e-3 leaves margin for MXU f32 pass reassociation while still catching
    # any real math error (which would be O(1)).
    assert jnp.allclose(out, ref, rtol=1e-3, atol=1e-3), (out, ref)

    # TODO(synk): the torch module's `use_embeddings=False` branch and the runtime
    # `assert torch.all(... >= -1e-05)` inside dict_cos_dist are control/validation glue,
    # not kernel compute, and are omitted here.
    print("KERNEL_OK")
</pallas_src>

<mosaic_0001>
module attributes {stable_mosaic.version = 11 : i64} {
  func.func @_structural_loss_kernel(%arg0: memref<32x16xf32, #tpu.memory_space<vmem>>, %arg1: memref<4x16x16xf32, #tpu.memory_space<vmem>>, %arg2: memref<4x8x32xf32, #tpu.memory_space<vmem>>, %arg3: memref<96x128xf32, #tpu.memory_space<vmem>>, %arg4: memref<2xf32, #tpu.memory_space<smem>>, %arg5: memref<1x4xf32, #tpu.memory_space<vmem>>) attributes {dimension_semantics = [], scalar_prefetch = 0 : i64, scratch_operands = 0 : i64, tpu.core_type = #tpu.core_type<tc>} {
    %c0 = arith.constant 0 : index
    %c0_0 = arith.constant 0 : index
    %0 = vector.load %arg3[%c0, %c0_0] : memref<96x128xf32, #tpu.memory_space<vmem>>, vector<16x32xf32>
    %c16 = arith.constant 16 : index
    %c0_1 = arith.constant 0 : index
    %1 = vector.load %arg3[%c16, %c0_1] : memref<96x128xf32, #tpu.memory_space<vmem>>, vector<32x8xf32>
    %c48 = arith.constant 48 : index
    %c0_2 = arith.constant 0 : index
    %2 = vector.load %arg3[%c48, %c0_2] : memref<96x128xf32, #tpu.memory_space<vmem>>, vector<32x32xf32>
    %c80 = arith.constant 80 : index
    %c0_3 = arith.constant 0 : index
    %3 = vector.load %arg3[%c80, %c0_3] : memref<96x128xf32, #tpu.memory_space<vmem>>, vector<4x8xf32>
    %c84 = arith.constant 84 : index
    %c0_4 = arith.constant 0 : index
    %4 = vector.load %arg3[%c84, %c0_4] : memref<96x128xf32, #tpu.memory_space<vmem>>, vector<4x16xf32>
    %c88 = arith.constant 88 : index
    %c0_5 = arith.constant 0 : index
    %5 = vector.load %arg3[%c88, %c0_5] : memref<96x128xf32, #tpu.memory_space<vmem>>, vector<4x16xf32>
    %c92 = arith.constant 92 : index
    %c0_6 = arith.constant 0 : index
    %6 = vector.load %arg3[%c92, %c0_6] : memref<96x128xf32, #tpu.memory_space<vmem>>, vector<4x8xf32>
    %c0_7 = arith.constant 0 : index
    %7 = memref.load %arg4[%c0_7] : memref<2xf32, #tpu.memory_space<smem>>
    %c1 = arith.constant 1 : index
    %8 = memref.load %arg4[%c1] : memref<2xf32, #tpu.memory_space<smem>>
    %c0_8 = arith.constant 0 : index
    %c0_9 = arith.constant 0 : index
    %9 = vector.load %arg0[%c0_8, %c0_9] : memref<32x16xf32, #tpu.memory_space<vmem>>, vector<32x16xf32>
    %cst = arith.constant dense<0.000000e+00> : vector<32x32xf32>
    %10 = tpu.matmul %9, %0, %cst {dimension_numbers = #tpu.dot_dimension_numbers<[1], [0], [0], [1], [0, 0, 1, 1], [], []>} : vector<32x16xf32>, vector<16x32xf32>, vector<32x32xf32> -> vector<32x32xf32>
    %11 = arith.addf %10, %2 : vector<32x32xf32>
    %cst_10 = arith.constant 0.000000e+00 : f32
    %12 = vector.broadcast %cst_10 : f32 to vector<32x32xf32>
    %13 = arith.maximumf %11, %12 : vector<32x32xf32>
    %14 = vector.shape_cast %13 : vector<32x32xf32> to vector<4x8x32xf32>
    %cst_11 = arith.constant dense<0.000000e+00> : vector<4x32xf32>
    %15 = vector.multi_reduction <add>, %14, %cst_11 [1] : vector<4x8x32xf32> to vector<4x32xf32>
    %cst_12 = arith.constant dense<0.000000e+00> : vector<4x8xf32>
    %16 = tpu.matmul %15, %1, %cst_12 {dimension_numbers = #tpu.dot_dimension_numbers<[1], [0], [0], [1], [0, 0, 1, 1], [], []>} : vector<4x32xf32>, vector<32x8xf32>, vector<4x8xf32> -> vector<4x8xf32>
    %17 = arith.addf %16, %3 : vector<4x8xf32>
    %cst_13 = arith.constant dense<0xFF800000> : vector<4xf32>
    %18 = vector.multi_reduction <maximumf>, %17, %cst_13 [1] : vector<4x8xf32> to vector<4xf32>
    %19 = vector.shape_cast %18 : vector<4xf32> to vector<4x1xf32>
    %20 = vector.broadcast %19 : vector<4x1xf32> to vector<4x8xf32>
    %21 = arith.subf %17, %20 : vector<4x8xf32>
    %22 = math.exp %21 : vector<4x8xf32>
    %cst_14 = arith.constant dense<0.000000e+00> : vector<4xf32>
    %23 = vector.multi_reduction <add>, %22, %cst_14 [1] : vector<4x8xf32> to vector<4xf32>
    %24 = vector.shape_cast %23 : vector<4xf32> to vector<4x1xf32>
    %25 = vector.broadcast %24 : vector<4x1xf32> to vector<4x8xf32>
    %26 = arith.divf %22, %25 : vector<4x8xf32>
    %c0_15 = arith.constant 0 : index
    %c0_16 = arith.constant 0 : index
    %c0_17 = arith.constant 0 : index
    %27 = vector.load %arg1[%c0_15, %c0_16, %c0_17] : memref<4x16x16xf32, #tpu.memory_space<vmem>>, vector<4x8x16xf32>
    %cst_18 = arith.constant dense<0.000000e+00> : vector<4x16xf32>
    %28 = vector.multi_reduction <add>, %27, %cst_18 [1] : vector<4x8x16xf32> to vector<4x16xf32>
    %c0_19 = arith.constant 0 : index
    %c8 = arith.constant 8 : index
    %c0_20 = arith.constant 0 : index
    %29 = vector.load %arg1[%c0_19, %c8, %c0_20] : memref<4x16x16xf32, #tpu.memory_space<vmem>>, vector<4x8x16xf32>
    %cst_21 = arith.constant dense<0.000000e+00> : vector<4x16xf32>
    %30 = vector.multi_reduction <add>, %29, %cst_21 [1] : vector<4x8x16xf32> to vector<4x16xf32>
    %31 = arith.mulf %28, %4 : vector<4x16xf32>
    %cst_22 = arith.constant dense<0.000000e+00> : vector<4xf32>
    %32 = vector.multi_reduction <add>, %31, %cst_22 [1] : vector<4x16xf32> to vector<4xf32>
    %33 = arith.mulf %30, %5 : vector<4x16xf32>
    %cst_23 = arith.constant dense<0.000000e+00> : vector<4xf32>
    %34 = vector.multi_reduction <add>, %33, %cst_23 [1] : vector<4x16xf32> to vector<4xf32>
    %35 = arith.addf %32, %34 : vector<4xf32>
    %36 = vector.broadcast %8 : f32 to vector<4xf32>
    %37 = arith.addf %35, %36 : vector<4xf32>
    %c0_24 = arith.constant 0 : index
    %c0_25 = arith.constant 0 : index
    %c0_26 = arith.constant 0 : index
    %38 = vector.load %arg2[%c0_24, %c0_25, %c0_26] : memref<4x8x32xf32, #tpu.memory_space<vmem>>, vector<4x8x32xf32>
    %cst_27 = arith.constant dense<0.000000e+00> : vector<4x32xf32>
    %39 = vector.multi_reduction <add>, %38, %cst_27 [1] : vector<4x8x32xf32> to vector<4x32xf32>
    %40 = arith.mulf %15, %39 : vector<4x32xf32>
    %cst_28 = arith.constant dense<0.000000e+00> : vector<4xf32>
    %41 = vector.multi_reduction <add>, %40, %cst_28 [1] : vector<4x32xf32> to vector<4xf32>
    %42 = arith.mulf %15, %15 : vector<4x32xf32>
    %cst_29 = arith.constant dense<0.000000e+00> : vector<4xf32>
    %43 = vector.multi_reduction <add>, %42, %cst_29 [1] : vector<4x32xf32> to vector<4xf32>
    %44 = arith.mulf %39, %39 : vector<4x32xf32>
    %cst_30 = arith.constant dense<0.000000e+00> : vector<4xf32>
    %45 = vector.multi_reduction <add>, %44, %cst_30 [1] : vector<4x32xf32> to vector<4xf32>
    %cst_31 = arith.constant 9.99999993E-9 : f32
    %cst_32 = arith.constant 9.99999993E-9 : f32
    %46 = arith.mulf %cst_31, %cst_32 : f32
    %47 = vector.broadcast %46 : f32 to vector<4xf32>
    %48 = arith.maximumf %43, %47 : vector<4xf32>
    %49 = math.rsqrt %48 : vector<4xf32>
    %cst_33 = arith.constant 9.99999993E-9 : f32
    %cst_34 = arith.constant 9.99999993E-9 : f32
    %50 = arith.mulf %cst_33, %cst_34 : f32
    %51 = vector.broadcast %50 : f32 to vector<4xf32>
    %52 = arith.maximumf %45, %51 : vector<4xf32>
    %53 = math.rsqrt %52 : vector<4xf32>
    %54 = arith.mulf %49, %53 : vector<4xf32>
    %55 = arith.mulf %41, %54 : vector<4xf32>
    %cst_35 = arith.constant 1.000000e+00 : f32
    %56 = vector.broadcast %cst_35 : f32 to vector<4xf32>
    %57 = arith.subf %56, %55 : vector<4xf32>
    %cst_36 = arith.constant dense<0xFF800000> : vector<4xf32>
    %58 = vector.multi_reduction <maximumf>, %26, %cst_36 [1] : vector<4x8xf32> to vector<4xf32>
    %59 = vector.shape_cast %58 : vector<4xf32> to vector<4x1xf32>
    %60 = vector.broadcast %59 : vector<4x1xf32> to vector<4x8xf32>
    %61 = arith.subf %26, %60 : vector<4x8xf32>
    %62 = math.exp %61 : vector<4x8xf32>
    %cst_37 = arith.constant dense<0.000000e+00> : vector<4xf32>
    %63 = vector.multi_reduction <add>, %62, %cst_37 [1] : vector<4x8xf32> to vector<4xf32>
    %64 = vector.shape_cast %63 : vector<4xf32> to vector<4x1xf32>
    %65 = math.log %64 : vector<4x1xf32>
    %66 = arith.addf %65, %59 : vector<4x1xf32>
    %67 = vector.broadcast %66 : vector<4x1xf32> to vector<4x8xf32>
    %68 = arith.subf %26, %67 : vector<4x8xf32>
    %69 = arith.mulf %6, %68 : vector<4x8xf32>
    %cst_38 = arith.constant dense<0.000000e+00> : vector<4xf32>
    %70 = vector.multi_reduction <add>, %69, %cst_38 [1] : vector<4x8xf32> to vector<4xf32>
    %cst_39 = arith.constant 0.000000e+00 : f32
    %71 = vector.broadcast %cst_39 : f32 to vector<4xf32>
    %72 = arith.subf %71, %70 : vector<4xf32>
    %73 = vector.broadcast %7 : f32 to vector<4xf32>
    %74 = arith.subf %73, %72 : vector<4xf32>
    %75 = arith.mulf %74, %74 : vector<4xf32>
    %76 = arith.mulf %74, %75 : vector<4xf32>
    %77 = arith.addf %37, %57 : vector<4xf32>
    %78 = arith.mulf %76, %77 : vector<4xf32>
    %79 = vector.shape_cast %78 : vector<4xf32> to vector<1x4xf32>
    %c0_40 = arith.constant 0 : index
    %c0_41 = arith.constant 0 : index
    %80 = vector.load %arg5[%c0_40, %c0_41] : memref<1x4xf32, #tpu.memory_space<vmem>>, vector<1x4xf32>
    tpu.vector_store %arg5[%c0_40, %c0_41], %79 {strides = array<i32>} : memref<1x4xf32, #tpu.memory_space<vmem>>, vector<1x4xf32>,
    return
  }
}

</mosaic_0001>

<llo_original>
// kernel: structural_loss_pallas.1
$region0: #{structural_loss_pallas.1}
  #allocation0 [shape = 'u32[]', space=smem, size = 0x4, offset = 0x4, fixed_abs, tag = 'smem constant byte address 0x4 - core index']
  #allocation1 [shape = 'u32[144,128]{1,0:T(1,128)}', space=vmem, size = 0x12000, scoped, tag = 'internal scratch']
  %s0 = inlined_call_operand.vmem [shape: f32[32,16], index: 0, kind: input, shape index: {}]
  %s1 = inlined_call_operand.vmem [shape: f32[4,16,16], index: 1, kind: input, shape index: {}]
  %s2 = inlined_call_operand.hbm [shape: f32[4,8,32], index: 2, kind: input, shape index: {}]
  %s3 = inlined_call_operand.vmem [shape: f32[96,128], index: 3, kind: input, shape index: {}]
  %s4 = inlined_call_operand.vmem [shape: f32[2], index: 4, kind: input, shape index: {}]
  %s5 = inlined_call_operand.hbm [shape: f32[1,4], index: 5, kind: output, shape index: {}]
  %s6 = sld [smem:[#allocation0]]
  $region38: #{structural_loss_pallas.1} parent=0
    _
  %s8 = ssub.s32 1, %s6
  %s9 = scalar_select 0, %s8, %s6
  $region1: #{structural_loss_pallas.1} parent=0
    #allocation2 [shape = 'u8[16384]{0}', space=vmem, size = 0x4000, scoped, tag = 'input window, operand 2, single buffered']
    #allocation3 [shape = 's32[1]{0}', space=sflag, size = 0x4, scoped, tag = 'scoped memory for structural_loss_pallas.1']
    #allocation4 [shape = 's32[1]{0}', space=sflag, size = 0x4, scoped, tag = 'scoped memory for structural_loss_pallas.1']
    #allocation5 [shape = 's32[1]{0}', space=sflag, size = 0x4, scoped, tag = 'scoped memory for structural_loss_pallas.1']
    #allocation6 [shape = 'u8[512]{0}', space=smem, size = 0x200, scoped, tag = 'input window, operand 4, single buffered']
    #allocation7 [shape = 'u8[512]{0}', space=vmem, size = 0x400, scoped, tag = 'output window, operand 0, single buffered']
    %10 = vsyncpa [#allocation3], 0
    %11 = vsyncpa [#allocation5], 0
    %12 = vsyncpa [#allocation4], 0
    // Predicated region
    $region2: #{structural_loss_pallas.1} parent=1 // pred_check
      _
    $region3: #{structural_loss_pallas.1} parent=1 // pred_check_branch
      %14 = sbr.rel (0) target = $region5
    $region4: #{structural_loss_pallas.1} parent=1 // pred_region
      _
    $region5: #{structural_loss_pallas.1} parent=1 // pred_fallthru
      _
    // Predicated region
    $region6: #{structural_loss_pallas.1} parent=1 // pred_check
      _
    $region7: #{structural_loss_pallas.1} parent=1 // pred_check_branch
      %16 = sbr.rel (0) target = $region9
    $region8: #{structural_loss_pallas.1} parent=1 // pred_region
      _
    $region9: #{structural_loss_pallas.1} parent=1 // pred_fallthru
      _
    // Predicated region
    $region10: #{structural_loss_pallas.1} parent=1 // pred_check
      _
    $region11: #{structural_loss_pallas.1} parent=1 // pred_check_branch
      %18 = sbr.rel (0) target = $region13
    $region12: #{structural_loss_pallas.1} parent=1 // pred_region
      %s20 = ssub.s32 512, 512
      %21 = vsyncadd [#allocation3], %s20
      %s22 = sshll.u32 [#allocation2], 4
      %s23 = int_to_ptr.vmem [resolvable:$true] %s22
      %28 = dma.hbm_to_vmem [thread:$0]  %s2, 512, %s23, [#allocation3], 128, 128, 8
    $region13: #{structural_loss_pallas.1} parent=1 // pred_fallthru
      _
    // Predicated region
    $region14: #{structural_loss_pallas.1} parent=1 // pred_check
      _
    $region15: #{structural_loss_pallas.1} parent=1 // pred_check_branch
      %30 = sbr.rel (0) target = $region17
    $region16: #{structural_loss_pallas.1} parent=1 // pred_region
      _
    $region17: #{structural_loss_pallas.1} parent=1 // pred_fallthru
      _
    // Predicated region
    $region18: #{structural_loss_pallas.1} parent=1 // pred_check
      _
    $region19: #{structural_loss_pallas.1} parent=1 // pred_check_branch
      %32 = sbr.rel (0) target = $region21
    $region20: #{structural_loss_pallas.1} parent=1 // pred_region
      %s34 = ssub.s32 16, 16
      %35 = vsyncadd [#allocation5], %s34
      %s37 = sshll.u32 %s4, 4
      %s38 = int_to_ptr.vmem [resolvable:$true] %s37
      %40 = dma.vmem_to_smem %s38, 16, [#allocation6], [#allocation5]
    $region21: #{structural_loss_pallas.1} parent=1 // pred_fallthru
      _
    // Predicated region
    $region22: #{structural_loss_pallas.1} parent=1 // pred_check
      _
    $region23: #{structural_loss_pallas.1} parent=1 // pred_check_branch
      %42 = sbr.rel (0) target = $region25
    $region24: #{structural_loss_pallas.1} parent=1 // pred_region
      %43 = dma.done [#allocation3], 512
    $region25: #{structural_loss_pallas.1} parent=1 // pred_fallthru
      _
    // Predicated region
    $region26: #{structural_loss_pallas.1} parent=1 // pred_check
      _
    $region27: #{structural_loss_pallas.1} parent=1 // pred_check_branch
      %45 = sbr.rel (0) target = $region29
    $region28: #{structural_loss_pallas.1} parent=1 // pred_region
      %46 = dma.done [#allocation5], 16
    $region29: #{structural_loss_pallas.1} parent=1 // pred_fallthru
      _
    %47 = sfence
    %v48 = vld [vmem:[%s3] sm:$0xff]
    %v49 = vld [vmem:[%s3 + $0x8] sm:$0xff]
    %v50 = vld [vmem:[%s3 + $0x10] sm:$0xff]
    %v51 = vld [vmem:[%s3 + $0x18] sm:$0xff]
    %v52 = vld [vmem:[%s3 + $0x20] sm:$0xff]
    %v53 = vld [vmem:[%s3 + $0x28] sm:$0xff]
    %v54 = vld [vmem:[%s3 + $0x30] sm:$0xff]
    %v55 = vld [vmem:[%s3 + $0x38] sm:$0xff]
    %v56 = vld [vmem:[%s3 + $0x40] sm:$0xff]
    %v57 = vld [vmem:[%s3 + $0x48] sm:$0xff]
    %v58 = vld [vmem:[%s3 + $0x50] sm:$0xf]
    %v59 = vld [vmem:[%s3 + $0x54] sm:$0xf]
    %v60 = vld [vmem:[%s3 + $0x58] sm:$0xf]
    %v61 = vld [vmem:[%s3 + $0x5c] sm:$0xf]
    %s62 = sld [smem:[#allocation6]]
    %s63 = sld [smem:[#allocation6 + $0x1]]
    %v64 = vld [vmem:[%s0] sm:$0xff]
    %v65 = vld [vmem:[%s0 + $0x8] sm:$0xff]
    %v66 = vld [vmem:[%s0 + $0x10] sm:$0xff]
    %v67 = vld [vmem:[%s0 + $0x18] sm:$0xff]
    %vm68 = vcmask 130048
    %v70 = vsel %vm68, %v64, 0
    %v73 = vsel %vm68, %v65, 0
    %v76 = vsel %vm68, %v66, 0
    %v79 = vsel %vm68, %v67, 0
    %81 = vmatprep.subr.mxu0 0.0
    %82 = vmatpush1.msra.mxu0 %v48
    %83 = vmatprep.subr.mxu0 0.0
    %84 = vmatpush1.msra.mxu0 %v49
    %85 = vmatprep.subr.mxu0 0.0
    %86 = vmatpush1.msra.mxu0 0.0
    %87 = vmatprep.subr.mxu0 0.0
    %88 = vmatpush1.msra.mxu0 0.0
    %89 = vmatprep.subr.mxu0 0.0
    %90 = vmatpush1.msra.mxu0 0.0
    %91 = vmatprep.subr.mxu0 0.0
    %92 = vmatpush1.msra.mxu0 0.0
    %93 = vmatprep.subr.mxu0 0.0
    %94 = vmatpush1.msra.mxu0 0.0
    %95 = vmatprep.subr.mxu0 0.0
    %96 = vmatpush1.msra.mxu0 0.0
    %97 = vmatprep.subr.mxu0 0.0
    %98 = vmatpush1.msra.mxu0 0.0
    %99 = vmatprep.subr.mxu0 0.0
    %100 = vmatpush1.msra.mxu0 0.0
    %101 = vmatprep.subr.mxu0 0.0
    %102 = vmatpush1.msra.mxu0 0.0
    %103 = vmatprep.subr.mxu0 0.0
    %104 = vmatpush1.msra.mxu0 0.0
    %105 = vmatprep.subr.mxu0 0.0
    %106 = vmatpush1.msra.mxu0 0.0
    %107 = vmatprep.subr.mxu0 0.0
    %108 = vmatpush1.msra.mxu0 0.0
    %109 = vmatprep.subr.mxu0 0.0
    %110 = vmatpush1.msra.mxu0 0.0
    %111 = vmatprep.subr.mxu0 0.0
    %112 = vmatpush1.msra.mxu0 0.0
    %113 = vmatprep.subr.mxu0 0.0
    %114 = vmatpush1.msra.mxu0 0.0
    %115 = vmatprep.subr.mxu0 0.0
    %116 = vmatpush1.msra.mxu0 0.0
    %117 = vmatprep.subr.mxu0 0.0
    %118 = vmatpush1.msra.mxu0 0.0
    %119 = vmatprep.subr.mxu0 0.0
    %120 = vmatpush1.msra.mxu0 0.0
    %121 = vmatprep.subr.mxu0 0.0
    %122 = vmatpush1.msra.mxu0 0.0
    %123 = vmatprep.subr.mxu0 0.0
    %124 = vmatpush1.msra.mxu0 0.0
    %125 = vmatprep.subr.mxu0 0.0
    %126 = vmatpush1.msra.mxu0 0.0
    %127 = vmatprep.subr.mxu0 0.0
    %128 = vmatpush1.msra.mxu0 0.0
    %129 = vmatprep.subr.mxu0 0.0
    %130 = vmatpush1.msra.mxu0 0.0
    %131 = vmatprep.subr.mxu0 0.0
    %132 = vmatpush1.msra.mxu0 0.0
    %133 = vmatprep.subr.mxu0 0.0
    %134 = vmatpush1.msra.mxu0 0.0
    %135 = vmatprep.subr.mxu0 0.0
    %136 = vmatpush1.msra.mxu0 0.0
    %137 = vmatprep.subr.mxu0 0.0
    %138 = vmatpush1.msra.mxu0 0.0
    %139 = vmatprep.subr.mxu0 0.0
    %140 = vmatpush1.msra.mxu0 0.0
    %141 = vmatprep.subr.mxu0 0.0
    %142 = vmatpush1.msra.mxu0 0.0
    %143 = vmatprep.subr.mxu0 0.0
    %144 = vmatpush1.msra.mxu0 0.0
    %145 = vmatprep.mubr.f32.mxu0 0.0
    %146 = vmatmul.mubr.f32.gmra.mrb[0].mxu0 %v70
    %v147 = vpop.f32.mrb[0].mxu0
    %v148 = vadd.f32 %v54, %v147
    %v149 = vpop.f32.mrb[0].mxu0
    %150 = vmatprep.mubr.f32.mxu0 0.0
    %151 = vmatmul.mubr.f32.gmra.mrb[0].mxu0 %v73
    %v152 = vpop.f32.mrb[0].mxu0
    %v153 = vadd.f32 %v55, %v152
    %v154 = vpop.f32.mrb[0].mxu0
    %155 = vmatprep.mubr.f32.mxu0 0.0
    %156 = vmatmul.mubr.f32.gmra.mrb[0].mxu0 %v76
    %v157 = vpop.f32.mrb[0].mxu0
    %v158 = vadd.f32 %v56, %v157
    %v159 = vpop.f32.mrb[0].mxu0
    %160 = vmatprep.mubr.f32.mxu0 0.0
    %161 = vmatmul.mubr.f32.gmra.mrb[0].mxu0 %v79
    %v162 = vpop.f32.mrb[0].mxu0
    %v163 = vadd.f32 %v57, %v162
    %v164 = vpop.f32.mrb[0].mxu0
    %165 = vdwg.mxu0
    %v166 = vmax.f32 %v148, 0.0
    %v167 = vmax.f32 %v153, 0.0
    %v168 = vmax.f32 %v158, 0.0
    %v169 = vmax.f32 %v163, 0.0
    %vm170 = vcmask 261120
    %v171 = vsel %vm170, %v166, 0.0
    %v172 = vrot.slane %v171, 4
    %v173 = vadd.f32 %v171, %v172
    %v174 = vrot.slane %v173, 2
    %v175 = vadd.f32 %v173, %v174
    %v176 = vrot.slane %v175, 1
    %v177 = vadd.f32 %v175, %v176
    %v178 = vsel %vm170, %v167, 0.0
    %v179 = vrot.slane %v178, 4
    %v180 = vadd.f32 %v178, %v179
    %v181 = vrot.slane %v180, 2
    %v182 = vadd.f32 %v180, %v181
    %v183 = vrot.slane %v182, 1
    %v184 = vadd.f32 %v182, %v183
    %v185 = vsel %vm170, %v168, 0.0
    %v186 = vrot.slane %v185, 4
    %v187 = vadd.f32 %v185, %v186
    %v188 = vrot.slane %v187, 2
    %v189 = vadd.f32 %v187, %v188
    %v190 = vrot.slane %v189, 1
    %v191 = vadd.f32 %v189, %v190
    %v192 = vsel %vm170, %v169, 0.0
    %v193 = vrot.slane %v192, 4
    %v194 = vadd.f32 %v192, %v193
    %v195 = vrot.slane %v194, 2
    %v196 = vadd.f32 %v194, %v195
    %v197 = vrot.slane %v196, 1
    %v198 = vadd.f32 %v196, %v197
    %vm203 = vcmask 1041409
    %v204 = vsel %vm203, %v184, %v177
    %vm205 = vcmask 1042434
    %v206 = vsel %vm205, %v191, %v204
    %vm207 = vcmask 1043459
    %v208 = vsel %vm207, %v198, %v206
    %v209 = vsel %vm170, %v208, 0
    %211 = vmatprep.subr.mxu0 0.0
    %212 = vmatpush1.msra.mxu0 %v50
    %213 = vmatprep.subr.mxu0 0.0
    %214 = vmatpush1.msra.mxu0 %v51
    %215 = vmatprep.subr.mxu0 0.0
    %216 = vmatpush1.msra.mxu0 %v52
    %217 = vmatprep.subr.mxu0 0.0
    %218 = vmatpush1.msra.mxu0 %v53
    %219 = vmatprep.subr.mxu0 0.0
    %220 = vmatpush1.msra.mxu0 0.0
    %221 = vmatprep.subr.mxu0 0.0
    %222 = vmatpush1.msra.mxu0 0.0
    %223 = vmatprep.subr.mxu0 0.0
    %224 = vmatpush1.msra.mxu0 0.0
    %225 = vmatprep.subr.mxu0 0.0
    %226 = vmatpush1.msra.mxu0 0.0
    %227 = vmatprep.subr.mxu0 0.0
    %228 = vmatpush1.msra.mxu0 0.0
    %229 = vmatprep.subr.mxu0 0.0
    %230 = vmatpush1.msra.mxu0 0.0
    %231 = vmatprep.subr.mxu0 0.0
    %232 = vmatpush1.msra.mxu0 0.0
    %233 = vmatprep.subr.mxu0 0.0
    %234 = vmatpush1.msra.mxu0 0.0
    %235 = vmatprep.subr.mxu0 0.0
    %236 = vmatpush1.msra.mxu0 0.0
    %237 = vmatprep.subr.mxu0 0.0
    %238 = vmatpush1.msra.mxu0 0.0
    %239 = vmatprep.subr.mxu0 0.0
    %240 = vmatpush1.msra.mxu0 0.0
    %241 = vmatprep.subr.mxu0 0.0
    %242 = vmatpush1.msra.mxu0 0.0
    %243 = vmatprep.subr.mxu0 0.0
    %244 = vmatpush1.msra.mxu0 0.0
    %245 = vmatprep.subr.mxu0 0.0
    %246 = vmatpush1.msra.mxu0 0.0
    %247 = vmatprep.subr.mxu0 0.0
    %248 = vmatpush1.msra.mxu0 0.0
    %249 = vmatprep.subr.mxu0 0.0
    %250 = vmatpush1.msra.mxu0 0.0
    %251 = vmatprep.subr.mxu0 0.0
    %252 = vmatpush1.msra.mxu0 0.0
    %253 = vmatprep.subr.mxu0 0.0
    %254 = vmatpush1.msra.mxu0 0.0
    %255 = vmatprep.subr.mxu0 0.0
    %256 = vmatpush1.msra.mxu0 0.0
    %257 = vmatprep.subr.mxu0 0.0
    %258 = vmatpush1.msra.mxu0 0.0
    %259 = vmatprep.subr.mxu0 0.0
    %260 = vmatpush1.msra.mxu0 0.0
    %261 = vmatprep.subr.mxu0 0.0
    %262 = vmatpush1.msra.mxu0 0.0
    %263 = vmatprep.subr.mxu0 0.0
    %264 = vmatpush1.msra.mxu0 0.0
    %265 = vmatprep.subr.mxu0 0.0
    %266 = vmatpush1.msra.mxu0 0.0
    %267 = vmatprep.subr.mxu0 0.0
    %268 = vmatpush1.msra.mxu0 0.0
    %269 = vmatprep.subr.mxu0 0.0
    %270 = vmatpush1.msra.mxu0 0.0
    %271 = vmatprep.subr.mxu0 0.0
    %272 = vmatpush1.msra.mxu0 0.0
    %273 = vmatprep.subr.mxu0 0.0
    %274 = vmatpush1.msra.mxu0 0.0
    %275 = vmatprep.mubr.f32.mxu0 0.0
    %276 = vmatmul.mubr.f32.gmra.mrb[0].mxu0 %v209
    %v277 = vpop.f32.mrb[0].mxu0
    %v278 = vadd.f32 %v58, %v277
    %v279 = vpop.f32.mrb[0].mxu0
    %280 = vdwg.mxu0
    %vm281 = vcmask 60416
    %v282 = vsel %vm281, %v278, -inf
    %283 = vmax.xlane.f32.xlu0 %v282
    %v284 = vpop.xlane.xlu0 %283
    %v285 = vsub.f32 %v278, %v284
    %v286 = vmul.f32 %v285, 1.442695
    %v287 = vpow.pop %v286
    %v288 = vsel %vm281, %v287, 0.0
    %289 = vadd.xlane.f32.xlu0 %v288
    %v290 = vpop.xlane.xlu0 %289
    %v291 = vrcp.pop %v290
    %v292 = vmul.f32 %v287, %v291
    %v293 = vld [vmem:[%s1] sm:$0xff]
    %v294 = vld [vmem:[%s1 + $0x10] sm:$0xff]
    %v295 = vld [vmem:[%s1 + $0x20] sm:$0xff]
    %v296 = vld [vmem:[%s1 + $0x30] sm:$0xff]
    %v297 = vsel %vm68, %v293, 0.0
    %v298 = vrot.slane %v297, 4
    %v299 = vadd.f32 %v297, %v298
    %v300 = vrot.slane %v299, 2
    %v301 = vadd.f32 %v299, %v300
    %v302 = vrot.slane %v301, 1
    %v303 = vadd.f32 %v301, %v302
    %v304 = vsel %vm68, %v294, 0.0
    %v305 = vrot.slane %v304, 4
    %v306 = vadd.f32 %v304, %v305
    %v307 = vrot.slane %v306, 2
    %v308 = vadd.f32 %v306, %v307
    %v309 = vrot.slane %v308, 1
    %v310 = vadd.f32 %v308, %v309
    %v311 = vsel %vm68, %v295, 0.0
    %v312 = vrot.slane %v311, 4
    %v313 = vadd.f32 %v311, %v312
    %v314 = vrot.slane %v313, 2
    %v315 = vadd.f32 %v313, %v314
    %v316 = vrot.slane %v315, 1
    %v317 = vadd.f32 %v315, %v316
    %v318 = vsel %vm68, %v296, 0.0
    %v319 = vrot.slane %v318, 4
    %v320 = vadd.f32 %v318, %v319
    %v321 = vrot.slane %v320, 2
    %v322 = vadd.f32 %v320, %v321
    %v323 = vrot.slane %v322, 1
    %v324 = vadd.f32 %v322, %v323
    %v325 = vld [vmem:[%s1 + $0x8] sm:$0xff]
    %v326 = vld [vmem:[%s1 + $0x18] sm:$0xff]
    %v327 = vld [vmem:[%s1 + $0x28] sm:$0xff]
    %v328 = vld [vmem:[%s1 + $0x38] sm:$0xff]
    %v329 = vsel %vm68, %v325, 0.0
    %v330 = vrot.slane %v329, 4
    %v331 = vadd.f32 %v329, %v330
    %v332 = vrot.slane %v331, 2
    %v333 = vadd.f32 %v331, %v332
    %v334 = vrot.slane %v333, 1
    %v335 = vadd.f32 %v333, %v334
    %v336 = vsel %vm68, %v326, 0.0
    %v337 = vrot.slane %v336, 4
    %v338 = vadd.f32 %v336, %v337
    %v339 = vrot.slane %v338, 2
    %v340 = vadd.f32 %v338, %v339
    %v341 = vrot.slane %v340, 1
    %v342 = vadd.f32 %v340, %v341
    %v343 = vsel %vm68, %v327, 0.0
    %v344 = vrot.slane %v343, 4
    %v345 = vadd.f32 %v343, %v344
    %v346 = vrot.slane %v345, 2
    %v347 = vadd.f32 %v345, %v346
    %v348 = vrot.slane %v347, 1
    %v349 = vadd.f32 %v347, %v348
    %v350 = vsel %vm68, %v328, 0.0
    %v351 = vrot.slane %v350, 4
    %v352 = vadd.f32 %v350, %v351
    %v353 = vrot.slane %v352, 2
    %v354 = vadd.f32 %v352, %v353
    %v355 = vrot.slane %v354, 1
    %v356 = vadd.f32 %v354, %v355
    %v358 = vrot.slane %v59, 1
    %v359 = vrot.slane %v59, 2
    %v360 = vrot.slane %v59, 3
    %v365 = vmul.f32 %v303, %v59
    %v366 = vmul.f32 %v310, %v358
    %v367 = vmul.f32 %v317, %v359
    %v368 = vmul.f32 %v324, %v360
    %v373 = vrot.slane %v366, 7
    %v374 = vsel %vm203, %v373, %v365
    %v375 = vrot.slane %v367, 6
    %v376 = vsel %vm205, %v375, %v374
    %v377 = vrot.slane %v368, 5
    %v378 = vsel %vm207, %v377, %v376
    %vm380 = vcmask 125952
    %v381 = vsel %vm380, %v378, 0.0
    %382 = vadd.xlane.f32.xlu0 %v381
    %v383 = vpop.xlane.xlu0 %382
    %v385 = vrot.slane %v60, 1
    %v386 = vrot.slane %v60, 2
    %v387 = vrot.slane %v60, 3
    %v392 = vmul.f32 %v335, %v60
    %v393 = vmul.f32 %v342, %v385
    %v394 = vmul.f32 %v349, %v386
    %v395 = vmul.f32 %v356, %v387
    %v400 = vrot.slane %v393, 7
    %v401 = vsel %vm203, %v400, %v392
    %v402 = vrot.slane %v394, 6
    %v403 = vsel %vm205, %v402, %v401
    %v404 = vrot.slane %v395, 5
    %v405 = vsel %vm207, %v404, %v403
    %v407 = vsel %vm380, %v405, 0.0
    %408 = vadd.xlane.f32.xlu0 %v407
    %v409 = vpop.xlane.xlu0 %408
    %v410 = vadd.f32 %v383, %v409
    %v411 = vstv %s63
    %v412 = vadd.f32 %v410, %v411
    %v413 = vld [vmem:[#allocation2] sm:$0xff]
    %v414 = vld [vmem:[#allocation2 + $0x8] sm:$0xff]
    %v415 = vld [vmem:[#allocation2 + $0x10] sm:$0xff]
    %v416 = vld [vmem:[#allocation2 + $0x18] sm:$0xff]
    %v417 = vsel %vm170, %v413, 0.0
    %v418 = vrot.slane %v417, 4
    %v419 = vadd.f32 %v417, %v418
    %v420 = vrot.slane %v419, 2
    %v421 = vadd.f32 %v419, %v420
    %v422 = vrot.slane %v421, 1
    %v423 = vadd.f32 %v421, %v422
    %v424 = vsel %vm170, %v414, 0.0
    %v425 = vrot.slane %v424, 4
    %v426 = vadd.f32 %v424, %v425
    %v427 = vrot.slane %v426, 2
    %v428 = vadd.f32 %v426, %v427
    %v429 = vrot.slane %v428, 1
    %v430 = vadd.f32 %v428, %v429
    %v431 = vsel %vm170, %v415, 0.0
    %v432 = vrot.slane %v431, 4
    %v433 = vadd.f32 %v431, %v432
    %v434 = vrot.slane %v433, 2
    %v435 = vadd.f32 %v433, %v434
    %v436 = vrot.slane %v435, 1
    %v437 = vadd.f32 %v435, %v436
    %v438 = vsel %vm170, %v416, 0.0
    %v439 = vrot.slane %v438, 4
    %v440 = vadd.f32 %v438, %v439
    %v441 = vrot.slane %v440, 2
    %v442 = vadd.f32 %v440, %v441
    %v443 = vrot.slane %v442, 1
    %v444 = vadd.f32 %v442, %v443
    %v445 = vmul.f32 %v177, %v423
    %v446 = vmul.f32 %v184, %v430
    %v447 = vmul.f32 %v191, %v437
    %v448 = vmul.f32 %v198, %v444
    %v453 = vsel %vm203, %v446, %v445
    %v454 = vsel %vm205, %v447, %v453
    %v455 = vsel %vm207, %v448, %v454
    %vm457 = vcmask 257024
    %v458 = vsel %vm457, %v455, 0.0
    %459 = vadd.xlane.f32.xlu0 %v458
    %v460 = vpop.xlane.xlu0 %459
    %v461 = vmul.f32 %v177, %v177
    %v462 = vmul.f32 %v184, %v184
    %v463 = vmul.f32 %v191, %v191
    %v464 = vmul.f32 %v198, %v198
    %v469 = vsel %vm203, %v462, %v461
    %v470 = vsel %vm205, %v463, %v469
    %v471 = vsel %vm207, %v464, %v470
    %v473 = vsel %vm457, %v471, 0.0
    %474 = vadd.xlane.f32.xlu0 %v473
    %v475 = vpop.xlane.xlu0 %474
    %v476 = vmul.f32 %v423, %v423
    %v477 = vmul.f32 %v430, %v430
    %v478 = vmul.f32 %v437, %v437
    %v479 = vmul.f32 %v444, %v444
    %v484 = vsel %vm203, %v477, %v476
    %v485 = vsel %vm205, %v478, %v484
    %v486 = vsel %vm207, %v479, %v485
    %v488 = vsel %vm457, %v486, 0.0
    %489 = vadd.xlane.f32.xlu0 %v488
    %v490 = vpop.xlane.xlu0 %489
    %v491 = vmax.f32 %v475, 1e-16
    %v492 = vrsqrt.pop %v491
    %v493 = vmax.f32 %v490, 1e-16
    %v494 = vrsqrt.pop %v493
    %v495 = vmul.f32 %v492, %v494
    %v496 = vmul.f32 %v460, %v495
    %v497 = vsub.f32 1.0, %v496
    %v498 = vsel %vm281, %v292, -inf
    %499 = vmax.xlane.f32.xlu0 %v498
    %v500 = vpop.xlane.xlu0 %499
    %v501 = vsub.f32 %v292, %v500
    %v502 = vmul.f32 %v501, 1.442695
    %v503 = vpow.pop %v502
    %v504 = vsel %vm281, %v503, 0.0
    %505 = vadd.xlane.f32.xlu0 %v504
    %v506 = vpop.xlane.xlu0 %505
    %v507 = vlog2.pop %v506
    %v508 = vmul.f32 %v507, 0.6931472
    %v509 = vadd.f32 %v508, %v500
    %v510 = vsub.f32 %v292, %v509
    %v511 = vmul.f32 %v61, %v510
    %v512 = vsel %vm281, %v511, 0.0
    %513 = vadd.xlane.f32.xlu0 %v512
    %v514 = vpop.xlane.xlu0 %513
    %v515 = vsub.f32 0.0, %v514
    %v516 = vstv %s62
    %v517 = vsub.f32 %v516, %v515
    %v518 = vmul.f32 %v517, %v517
    %v519 = vmul.f32 %v517, %v518
    %v520 = vadd.f32 %v412, %v497
    %v521 = vmul.f32 %v519, %v520
    %v523 = vlaneseq
    %v524 = vand.u32 %v523, 127
    %v525 = vlaneseq
    %v526 = vshrl.u32 %v525, 7
    %v527 = vsub.s32 %v524, %v526
    %v528 = vrot.slane %v521, %v527
    %vm530 = vcmask 24576
    %531 = vst.msk [vmem:[#allocation7] sm:$0x1] %vm530, %v528
    // Predicated region
    $region30: #{structural_loss_pallas.1} parent=1 // pred_check
      _
    $region31: #{structural_loss_pallas.1} parent=1 // pred_check_branch
      %533 = sbr.rel (0) target = $region33
    $region32: #{structural_loss_pallas.1} parent=1 // pred_region
      %s535 = ssub.s32 16, 16
      %536 = vsyncadd [#allocation4], %s535
      %s538 = sshll.u32 [#allocation7], 4
      %s539 = int_to_ptr.vmem [resolvable:$true] %s538
      %541 = dma.vmem_to_hbm [thread:$0]  %s539, 16, %s5, [#allocation4]
    $region33: #{structural_loss_pallas.1} parent=1 // pred_fallthru
      _
    // Predicated region
    $region34: #{structural_loss_pallas.1} parent=1 // pred_check
      _
    $region35: #{structural_loss_pallas.1} parent=1 // pred_check_branch
      %543 = sbr.rel (0) target = $region37
    $region36: #{structural_loss_pallas.1} parent=1 // pred_region
      %544 = dma.done [#allocation4], 16
    $region37: #{structural_loss_pallas.1} parent=1 // pred_fallthru
      _
    %545 = vsyncpa [#allocation3], 1
    %546 = vsyncpa [#allocation4], 1
    %547 = vsyncpa [#allocation5], 1

</llo_original>
